<compile_context>
chip_gen: v5e
topology: v5e:2x2
jax: 0.10.0
libtpu: 0.0.40
codegen_flags: <defaults>
</compile_context>

<pallas_src>
import numpy as np
import jax
import jax.numpy as jnp
from jax.experimental import pallas as pl
from jax.experimental.pallas import tpu as pltpu


def _circulant_neighbor(n):
    """0/1 matrix with ones at the (i±1) mod n off-diagonals (wrap-around)."""
    m = np.zeros((n, n), np.float32)
    for i in range(n):
        m[i, (i + 1) % n] = 1.0
        m[i, (i - 1) % n] = 1.0
    return m


def _boundary_loss_kernel(mask_ref, pred_ref, sh_ref, sw_ref, out_ref):
    m = mask_ref[0]          # (H, W)  MRI mask plane
    p = pred_ref[0]          # (H, W)  PET prediction plane
    sh = sh_ref[...]         # (H, H)  circulant ±1 neighbour matrix (rows / sublanes)
    sw = sw_ref[...]         # (W, W)  circulant ±1 neighbour matrix (cols / lanes)

    grad = jnp.abs(m - p)

    def neighbor_any(v):
        # circular "any 4-neighbour == v": exact 0/1 neighbour counts on the MXU
        eq = (m == v).astype(jnp.float32)
        cnt = (jnp.dot(sh, eq, preferred_element_type=jnp.float32)
               + jnp.dot(eq, sw, preferred_element_type=jnp.float32))
        return cnt > 0.5

    adj1 = neighbor_any(1.0)       # shared by two of the three branch conditions
    adj25 = neighbor_any(0.25)
    is0 = (m == 0.0)

    w = jnp.where((m == 0.25) & adj1, 0.75, 0.0)
    w = jnp.maximum(w, jnp.where(is0 & adj25, 0.25, 0.0))
    w = jnp.maximum(w, jnp.where(is0 & adj1, 1.0, 0.0))

    # per-plane partial reduction, W kept as the lane dim (single lane-dense store)
    out_ref[...] = jnp.sum(grad * w, axis=0, keepdims=True)[None]


def boundary_loss(MRI_mask, PET_pred):
    B, C, H, W = MRI_mask.shape
    P = B * C
    mask3 = MRI_mask.astype(jnp.float32).reshape(P, H, W)
    pred3 = PET_pred.astype(jnp.float32).reshape(P, H, W)
    sh = jnp.asarray(_circulant_neighbor(H))
    sw = jnp.asarray(_circulant_neighbor(W))

    cost = pl.CostEstimate(
        flops=P * (4 * H * H * W + 4 * H * W * W + 16 * H * W),
        transcendentals=0,
        bytes_accessed=(2 * P * H * W + H * H + W * W + P * W) * 4,
    )

    col_sums = pl.pallas_call(
        _boundary_loss_kernel,
        out_shape=jax.ShapeDtypeStruct((P, 1, W), jnp.float32),
        grid=(P,),
        in_specs=[
            pl.BlockSpec((1, H, W), lambda i: (i, 0, 0)),
            pl.BlockSpec((1, H, W), lambda i: (i, 0, 0)),
            pl.BlockSpec((H, H), lambda i: (0, 0)),
            pl.BlockSpec((W, W), lambda i: (0, 0)),
        ],
        out_specs=pl.BlockSpec((1, 1, W), lambda i: (i, 0, 0)),
        compiler_params=pltpu.CompilerParams(
            dimension_semantics=("parallel",)),
        cost_estimate=cost,
    )(mask3, pred3, sh, sw)

    # final scalar mean over all B*C*H*W elements (tiny glue)
    return jnp.sum(col_sums) / (B * C * H * W)


# ---------------- pure-JAX reference (verification only) ----------------

def _reference_forward(MRI_mask, PET_pred):
    def adj(v):
        up = jnp.roll(MRI_mask, -1, axis=2)
        down = jnp.roll(MRI_mask, 1, axis=2)
        left = jnp.roll(MRI_mask, -1, axis=3)
        right = jnp.roll(MRI_mask, 1, axis=3)
        return (up == v) | (down == v) | (left == v) | (right == v)

    grad = jnp.abs(MRI_mask - PET_pred)
    w = jnp.where((MRI_mask == 0.25) & adj(1.0), 0.75, 0.0)
    w = jnp.maximum(w, jnp.where((MRI_mask == 0.0) & adj(0.25), 0.25, 0.0))
    w = jnp.maximum(w, jnp.where((MRI_mask == 0.0) & adj(1.0), 1.0, 0.0))
    return jnp.mean(grad * w)


if __name__ == "__main__":
    key = jax.random.PRNGKey(0)
    k1, k2 = jax.random.split(key, 2)
    B, C, H, W = 2, 4, 16, 16
    # mask takes exact values from {0, 0.25, 0.5, 0.75, 1.0} so the module's
    # exact float equality tests are meaningful
    levels = jnp.array([0.0, 0.25, 0.5, 0.75, 1.0], jnp.float32)
    MRI_mask = levels[jax.random.randint(k1, (B, C, H, W), 0, 5)]
    PET_pred = jax.random.uniform(k2, (B, C, H, W), dtype=jnp.float32)

    loss = boundary_loss(MRI_mask, PET_pred)
    jax.block_until_ready(loss)

    ref = _reference_forward(MRI_mask, PET_pred)
    assert np.allclose(np.asarray(loss), np.asarray(ref), rtol=1e-5, atol=1e-6), (loss, ref)
    print("KERNEL_OK")
</pallas_src>

<mosaic_0001>
module attributes {stable_mosaic.version = 11 : i64} {
  func.func @_boundary_loss_kernel(%arg0: i32, %arg1: memref<1x16x16xf32, #tpu.memory_space<vmem>>, %arg2: memref<1x16x16xf32, #tpu.memory_space<vmem>>, %arg3: memref<16x16xf32, #tpu.memory_space<vmem>>, %arg4: memref<16x16xf32, #tpu.memory_space<vmem>>, %arg5: memref<1x1x16xf32, #tpu.memory_space<vmem>>) attributes {dimension_semantics = [#tpu.dimension_semantics<parallel>], iteration_bounds = array<i64: 8>, scalar_prefetch = 0 : i64, scratch_operands = 0 : i64, tpu.core_type = #tpu.core_type<tc>, window_params = [{transform_indices = @transform_0, window_bounds = array<i64: 1, 16, 16>}, {transform_indices = @transform_1, window_bounds = array<i64: 1, 16, 16>}, {pipeline_mode = #tpu.pipeline_mode<synchronous>, transform_indices = @transform_2, window_bounds = array<i64: 16, 16>}, {pipeline_mode = #tpu.pipeline_mode<synchronous>, transform_indices = @transform_3, window_bounds = array<i64: 16, 16>}, {transform_indices = @transform_4, window_bounds = array<i64: 1, 1, 16>}]} {
    %c0 = arith.constant 0 : index
    %c0_0 = arith.constant 0 : index
    %c0_1 = arith.constant 0 : index
    %0 = vector.load %arg1[%c0, %c0_0, %c0_1] : memref<1x16x16xf32, #tpu.memory_space<vmem>>, vector<1x16x16xf32>
    %1 = vector.shape_cast %0 : vector<1x16x16xf32> to vector<16x16xf32>
    %c0_2 = arith.constant 0 : index
    %c0_3 = arith.constant 0 : index
    %c0_4 = arith.constant 0 : index
    %2 = vector.load %arg2[%c0_2, %c0_3, %c0_4] : memref<1x16x16xf32, #tpu.memory_space<vmem>>, vector<1x16x16xf32>
    %3 = vector.shape_cast %2 : vector<1x16x16xf32> to vector<16x16xf32>
    %c0_5 = arith.constant 0 : index
    %c0_6 = arith.constant 0 : index
    %4 = vector.load %arg3[%c0_5, %c0_6] : memref<16x16xf32, #tpu.memory_space<vmem>>, vector<16x16xf32>
    %c0_7 = arith.constant 0 : index
    %c0_8 = arith.constant 0 : index
    %5 = vector.load %arg4[%c0_7, %c0_8] : memref<16x16xf32, #tpu.memory_space<vmem>>, vector<16x16xf32>
    %6 = arith.subf %1, %3 : vector<16x16xf32>
    %7 = math.absf %6 : vector<16x16xf32>
    %cst = arith.constant 1.000000e+00 : f32
    %8 = vector.broadcast %cst : f32 to vector<16x16xf32>
    %9 = arith.cmpf oeq, %1, %8 : vector<16x16xf32>
    %10 = arith.extui %9 : vector<16x16xi1> to vector<16x16xi32>
    %11 = arith.sitofp %10 : vector<16x16xi32> to vector<16x16xf32>
    %cst_9 = arith.constant dense<0.000000e+00> : vector<16x16xf32>
    %12 = tpu.matmul %4, %11, %cst_9 {dimension_numbers = #tpu.dot_dimension_numbers<[1], [0], [0], [1], [0, 0, 1, 1], [], []>} : vector<16x16xf32>, vector<16x16xf32>, vector<16x16xf32> -> vector<16x16xf32>
    %cst_10 = arith.constant dense<0.000000e+00> : vector<16x16xf32>
    %13 = tpu.matmul %11, %5, %cst_10 {dimension_numbers = #tpu.dot_dimension_numbers<[1], [0], [0], [1], [0, 0, 1, 1], [], []>} : vector<16x16xf32>, vector<16x16xf32>, vector<16x16xf32> -> vector<16x16xf32>
    %14 = arith.addf %12, %13 : vector<16x16xf32>
    %cst_11 = arith.constant 5.000000e-01 : f32
    %15 = vector.broadcast %cst_11 : f32 to vector<16x16xf32>
    %16 = arith.cmpf ogt, %14, %15 : vector<16x16xf32>
    %cst_12 = arith.constant 2.500000e-01 : f32
    %17 = vector.broadcast %cst_12 : f32 to vector<16x16xf32>
    %18 = arith.cmpf oeq, %1, %17 : vector<16x16xf32>
    %19 = arith.extui %18 : vector<16x16xi1> to vector<16x16xi32>
    %20 = arith.sitofp %19 : vector<16x16xi32> to vector<16x16xf32>
    %cst_13 = arith.constant dense<0.000000e+00> : vector<16x16xf32>
    %21 = tpu.matmul %4, %20, %cst_13 {dimension_numbers = #tpu.dot_dimension_numbers<[1], [0], [0], [1], [0, 0, 1, 1], [], []>} : vector<16x16xf32>, vector<16x16xf32>, vector<16x16xf32> -> vector<16x16xf32>
    %cst_14 = arith.constant dense<0.000000e+00> : vector<16x16xf32>
    %22 = tpu.matmul %20, %5, %cst_14 {dimension_numbers = #tpu.dot_dimension_numbers<[1], [0], [0], [1], [0, 0, 1, 1], [], []>} : vector<16x16xf32>, vector<16x16xf32>, vector<16x16xf32> -> vector<16x16xf32>
    %23 = arith.addf %21, %22 : vector<16x16xf32>
    %cst_15 = arith.constant 5.000000e-01 : f32
    %24 = vector.broadcast %cst_15 : f32 to vector<16x16xf32>
    %25 = arith.cmpf ogt, %23, %24 : vector<16x16xf32>
    %cst_16 = arith.constant 0.000000e+00 : f32
    %26 = vector.broadcast %cst_16 : f32 to vector<16x16xf32>
    %27 = arith.cmpf oeq, %1, %26 : vector<16x16xf32>
    %cst_17 = arith.constant 2.500000e-01 : f32
    %28 = vector.broadcast %cst_17 : f32 to vector<16x16xf32>
    %29 = arith.cmpf oeq, %1, %28 : vector<16x16xf32>
    %30 = arith.andi %29, %16 : vector<16x16xi1>
    %cst_18 = arith.constant 7.500000e-01 : f32
    %cst_19 = arith.constant 0.000000e+00 : f32
    %31 = vector.broadcast %cst_18 : f32 to vector<16x16xf32>
    %32 = vector.broadcast %cst_19 : f32 to vector<16x16xf32>
    %33 = arith.select %30, %31, %32 : vector<16x16xi1>, vector<16x16xf32>
    %34 = arith.andi %27, %25 : vector<16x16xi1>
    %cst_20 = arith.constant 2.500000e-01 : f32
    %cst_21 = arith.constant 0.000000e+00 : f32
    %35 = vector.broadcast %cst_20 : f32 to vector<16x16xf32>
    %36 = vector.broadcast %cst_21 : f32 to vector<16x16xf32>
    %37 = arith.select %34, %35, %36 : vector<16x16xi1>, vector<16x16xf32>
    %38 = arith.maximumf %33, %37 : vector<16x16xf32>
    %39 = arith.andi %27, %16 : vector<16x16xi1>
    %cst_22 = arith.constant 1.000000e+00 : f32
    %cst_23 = arith.constant 0.000000e+00 : f32
    %40 = vector.broadcast %cst_22 : f32 to vector<16x16xf32>
    %41 = vector.broadcast %cst_23 : f32 to vector<16x16xf32>
    %42 = arith.select %39, %40, %41 : vector<16x16xi1>, vector<16x16xf32>
    %43 = arith.maximumf %38, %42 : vector<16x16xf32>
    %44 = arith.mulf %7, %43 : vector<16x16xf32>
    %cst_24 = arith.constant dense<0.000000e+00> : vector<16xf32>
    %45 = vector.multi_reduction <add>, %44, %cst_24 [0] : vector<16x16xf32> to vector<16xf32>
    %46 = vector.shape_cast %45 : vector<16xf32> to vector<1x16xf32>
    %47 = vector.shape_cast %46 : vector<1x16xf32> to vector<1x1x16xf32>
    %c0_25 = arith.constant 0 : index
    %c0_26 = arith.constant 0 : index
    %c0_27 = arith.constant 0 : index
    %48 = vector.load %arg5[%c0_25, %c0_26, %c0_27] : memref<1x1x16xf32, #tpu.memory_space<vmem>>, vector<1x1x16xf32>
    tpu.vector_store %arg5[%c0_25, %c0_26, %c0_27], %47 {strides = array<i32>} : memref<1x1x16xf32, #tpu.memory_space<vmem>>, vector<1x1x16xf32>,
    return
  }
  func.func @transform_0(%arg0: i32) -> (i32, i32, i32) {
    %c0_i32 = arith.constant 0 : i32
    %c0_i32_0 = arith.constant 0 : i32
    %c0_i32_1 = arith.constant 0 : i32
    return %arg0, %c0_i32, %c0_i32_0 : i32, i32, i32
  }
  func.func @transform_1(%arg0: i32) -> (i32, i32, i32) {
    %c0_i32 = arith.constant 0 : i32
    %c0_i32_0 = arith.constant 0 : i32
    %c0_i32_1 = arith.constant 0 : i32
    return %arg0, %c0_i32, %c0_i32_0 : i32, i32, i32
  }
  func.func @transform_2(%arg0: i32) -> (i32, i32) {
    %c0_i32 = arith.constant 0 : i32
    %c0_i32_0 = arith.constant 0 : i32
    %c0_i32_1 = arith.constant 0 : i32
    return %c0_i32, %c0_i32_0 : i32, i32
  }
  func.func @transform_3(%arg0: i32) -> (i32, i32) {
    %c0_i32 = arith.constant 0 : i32
    %c0_i32_0 = arith.constant 0 : i32
    %c0_i32_1 = arith.constant 0 : i32
    return %c0_i32, %c0_i32_0 : i32, i32
  }
  func.func @transform_4(%arg0: i32) -> (i32, i32, i32) {
    %c0_i32 = arith.constant 0 : i32
    %c0_i32_0 = arith.constant 0 : i32
    %c0_i32_1 = arith.constant 0 : i32
    return %arg0, %c0_i32, %c0_i32_0 : i32, i32, i32
  }
}

</mosaic_0001>

<llo_original>
// kernel: tpu_custom_call.1
$region0: #{tpu_custom_call.1}
  #allocation0 [shape = 'u32[]', space=smem, size = 0x4, offset = 0x4, fixed_abs, tag = 'smem constant byte address 0x4 - core index']
  #allocation1 [shape = 'u32[72,128]{1,0:T(1,128)}', space=vmem, size = 0x9000, scoped, tag = 'internal scratch']
  %s0 = inlined_call_operand.hbm [shape: f32[8,16,16], index: 0, kind: input, shape index: {}]
  %s1 = inlined_call_operand.hbm [shape: f32[8,16,16], index: 1, kind: input, shape index: {}]
  %s2 = inlined_call_operand.hbm [shape: f32[16,16], index: 2, kind: input, shape index: {}]
  %s3 = inlined_call_operand.hbm [shape: f32[16,16], index: 3, kind: input, shape index: {}]
  %s4 = inlined_call_operand.hbm [shape: f32[8,1,16], index: 4, kind: output, shape index: {}]
  %s5 = sld [smem:[#allocation0]]
  $region65: #{tpu_custom_call.1} parent=0
    _
  %s7 = ssub.s32 1, %s5
  %s8 = scalar_select 0, %s7, %s5
  $region1: #{tpu_custom_call.1} parent=0
    #allocation2 [shape = 'u8[16384]{0}', space=vmem, size = 0x4000, scoped, tag = 'input window, operand 0']
    #allocation3 [shape = 's32[2]{0}', space=sflag, size = 0x8, scoped, tag = 'scoped memory for tpu_custom_call.1']
    #allocation4 [shape = 's32[2]{0}', space=sflag, size = 0x8, scoped, tag = 'scoped memory for tpu_custom_call.1']
    #allocation5 [shape = 'u8[16384]{0}', space=vmem, size = 0x4000, scoped, tag = 'input window, operand 1']
    #allocation6 [shape = 's32[2]{0}', space=sflag, size = 0x8, scoped, tag = 'scoped memory for tpu_custom_call.1']
    #allocation7 [shape = 'u8[8192]{0}', space=vmem, size = 0x2000, scoped, tag = 'input window, operand 2, single buffered']
    #allocation8 [shape = 'u8[8192]{0}', space=vmem, size = 0x2000, scoped, tag = 'input window, operand 3, single buffered']
    #allocation9 [shape = 's32[1]{0}', space=sflag, size = 0x4, scoped, tag = 'scoped memory for tpu_custom_call.1']
    #allocation10 [shape = 'u8[1024]{0}', space=vmem, size = 0x400, scoped, tag = 'output window, operand 0']
    %9 = vsyncpa [#allocation3], 0
    %s10 = scalar_lea.sflag [#allocation3], 1
    %11 = vsyncpa %s10, 0
    %12 = vsyncpa [#allocation6], 0
    %s13 = scalar_lea.sflag [#allocation6], 1
    %14 = vsyncpa %s13, 0
    %15 = vsyncpa [#allocation9], 0
    %16 = vsyncpa [#allocation4], 0
    %s17 = scalar_lea.sflag [#allocation4], 1
    %18 = vsyncpa %s17, 0
    loop: start=0, step=1, limit=10
    $region2: #{tpu_custom_call.1} parent=1 // loop_pre_header
      _
    $region3: #{tpu_custom_call.1} parent=1 // loop_header
      %s20 = sphi 0, %s24
      %p21 = scmp.ge.s32.totalorder %s20, 10
      %s30 = sphi 0, %s32
      %s33 = sphi 0, %s30
      %s34 = sphi 0, %s33
      %s50 = sphi 0, %s34
      %s56 = sphi 0, %s58
      %s59 = sphi 0, %s56
      %s60 = sphi 0, %s59
      %s76 = sphi 0, %s60
      %s80 = sphi 0, %s80
      %s82 = sphi 0, %s80
      %s83 = sphi 0, %s82
      %s97 = sphi 0, %s83
      %s101 = sphi 0, %s101
      %s103 = sphi 0, %s101
      %s104 = sphi 0, %s103
      %s118 = sphi 0, %s104
      %s124 = sphi 0, %s126
      %s127 = sphi 0, %s124
      %s128 = sphi 0, %s127
      %s144 = sphi 0, %s128
    $region4: #{tpu_custom_call.1} parent=1 // loop_header_branch
      %23 = sbr.rel (%p21) target = $region8
    $region5: #{tpu_custom_call.1} parent=1 // loop_body
      %s25 = ssub.s32 %s20, 1
      %s26 = ssub.s32 %s20, 2
      %s27 = sadd.s32 %s20, 1
      %s28 = ssub.s32 %s20, %s27
      %p29 = scmp.eq.s32.totalorder %s28, 0
      %s31 = sadd.s32 %s30, 1
      %s32 = scalar_select %p29, %s30, %s31
      %p35 = pneg %p29
      %p36 = scmp.eq.s32.totalorder %s20, 7
      %p37 = por %p35, %p36
      %p38 = scmp.ne.s32.totalorder %s30, %s33
      %p39 = scmp.eq.s32.totalorder %s20, 0
      %p40 = por %p38, %p39
      %p41 = scmp.ne.s32.totalorder %s30, %s33
      %p42 = scmp.eq.s32.totalorder %s25, 7
      %p43 = por %p41, %p42
      %p44 = scmp.ne.s32.totalorder %s33, %s34
      %p45 = scmp.eq.s32.totalorder %s25, 0
      %p46 = por %p44, %p45
      %p47 = scmp.ne.s32.totalorder %s33, %s34
      %p48 = scmp.eq.s32.totalorder %s26, 7
      %p49 = por %p47, %p48
      %p51 = scmp.ne.s32.totalorder %s34, %s50
      %p52 = scmp.eq.s32.totalorder %s26, 0
      %p53 = por %p51, %p52
      %s54 = ssub.s32 %s20, %s27
      %p55 = scmp.eq.s32.totalorder %s54, 0
      %s57 = sadd.s32 %s56, 1
      %s58 = scalar_select %p55, %s56, %s57
      %p61 = pneg %p55
      %p62 = scmp.eq.s32.totalorder %s20, 7
      %p63 = por %p61, %p62
      %p64 = scmp.ne.s32.totalorder %s56, %s59
      %p65 = scmp.eq.s32.totalorder %s20, 0
      %p66 = por %p64, %p65
      %p67 = scmp.ne.s32.totalorder %s56, %s59
      %p68 = scmp.eq.s32.totalorder %s25, 7
      %p69 = por %p67, %p68
      %p70 = scmp.ne.s32.totalorder %s59, %s60
      %p71 = scmp.eq.s32.totalorder %s25, 0
      %p72 = por %p70, %p71
      %p73 = scmp.ne.s32.totalorder %s59, %s60
      %p74 = scmp.eq.s32.totalorder %s26, 7
      %p75 = por %p73, %p74
      %p77 = scmp.ne.s32.totalorder %s60, %s76
      %p78 = scmp.eq.s32.totalorder %s26, 0
      %p79 = por %p77, %p78
      %s81 = sadd.s32 %s80, 1
      %p84 = scmp.eq.s32.totalorder %s20, 7
      %p85 = scmp.ne.s32.totalorder %s80, %s82
      %p86 = scmp.eq.s32.totalorder %s20, 0
      %p87 = por %p85, %p86
      %p88 = scmp.ne.s32.totalorder %s80, %s82
      %p89 = scmp.eq.s32.totalorder %s25, 7
      %p90 = por %p88, %p89
      %p91 = scmp.ne.s32.totalorder %s82, %s83
      %p92 = scmp.eq.s32.totalorder %s25, 0
      %p93 = por %p91, %p92
      %p94 = scmp.ne.s32.totalorder %s82, %s83
      %p95 = scmp.eq.s32.totalorder %s26, 7
      %p96 = por %p94, %p95
      %p98 = scmp.ne.s32.totalorder %s83, %s97
      %p99 = scmp.eq.s32.totalorder %s26, 0
      %p100 = por %p98, %p99
      %s102 = sadd.s32 %s101, 1
      %p105 = scmp.eq.s32.totalorder %s20, 7
      %p106 = scmp.ne.s32.totalorder %s101, %s103
      %p107 = scmp.eq.s32.totalorder %s20, 0
      %p108 = por %p106, %p107
      %p109 = scmp.ne.s32.totalorder %s101, %s103
      %p110 = scmp.eq.s32.totalorder %s25, 7
      %p111 = por %p109, %p110
      %p112 = scmp.ne.s32.totalorder %s103, %s104
      %p113 = scmp.eq.s32.totalorder %s25, 0
      %p114 = por %p112, %p113
      %p115 = scmp.ne.s32.totalorder %s103, %s104
      %p116 = scmp.eq.s32.totalorder %s26, 7
      %p117 = por %p115, %p116
      %p119 = scmp.ne.s32.totalorder %s104, %s118
      %p120 = scmp.eq.s32.totalorder %s26, 0
      %p121 = por %p119, %p120
      %s122 = ssub.s32 %s20, %s27
      %p123 = scmp.eq.s32.totalorder %s122, 0
      %s125 = sadd.s32 %s124, 1
      %s126 = scalar_select %p123, %s124, %s125
      %p129 = pneg %p123
      %p130 = scmp.eq.s32.totalorder %s20, 7
      %p131 = por %p129, %p130
      %p132 = scmp.ne.s32.totalorder %s124, %s127
      %p133 = scmp.eq.s32.totalorder %s20, 0
      %p134 = por %p132, %p133
      %p135 = scmp.ne.s32.totalorder %s124, %s127
      %p136 = scmp.eq.s32.totalorder %s25, 7
      %p137 = por %p135, %p136
      %p138 = scmp.ne.s32.totalorder %s127, %s128
      %p139 = scmp.eq.s32.totalorder %s25, 0
      %p140 = por %p138, %p139
      %p141 = scmp.ne.s32.totalorder %s127, %s128
      %p142 = scmp.eq.s32.totalorder %s26, 7
      %p143 = por %p141, %p142
      %p145 = scmp.ne.s32.totalorder %s128, %s144
      %p146 = scmp.eq.s32.totalorder %s26, 0
      %p147 = por %p145, %p146
      %p148 = scmp.le.s32.totalorder 1, %s20
      %p149 = scmp.lt.s32.totalorder %s20, 9
      %p150 = pnand %p148, %p149
      %p151 = pneg %p150
      // Predicated region
      $region9: #{tpu_custom_call.1} parent=5 // pred_check
        _
      $region10: #{tpu_custom_call.1} parent=5 // pred_check_branch
        %153 = sbr.rel (%p150) target = $region12
      $region11: #{tpu_custom_call.1} parent=5 // pred_region
        %s154 = ssub.s32 %s20, 1
        // Predicated region
        $region13: #{tpu_custom_call.1} parent=11 // pred_check
          %p155 = pneg %p93
        $region14: #{tpu_custom_call.1} parent=11 // pred_check_branch
          %157 = sbr.rel (%p155) target = $region16
        $region15: #{tpu_custom_call.1} parent=11 // pred_region
          %159 = vsyncadd [#allocation6], 0
          %s160 = sshll.u32 %s2, 4
          %s161 = int_to_ptr.hbm [resolvable:$true] %s160
          %s162 = sshll.u32 [#allocation7], 4
          %s163 = int_to_ptr.vmem [resolvable:$true] %s162
          %168 = dma.hbm_to_vmem [thread:$0]  %s161, 256, %s163, [#allocation6], 128, 128, 8
        $region16: #{tpu_custom_call.1} parent=11 // pred_fallthru
          _
        // Predicated region
        $region17: #{tpu_custom_call.1} parent=11 // pred_check
          %p169 = pneg %p114
        $region18: #{tpu_custom_call.1} parent=11 // pred_check_branch
          %171 = sbr.rel (%p169) target = $region20
        $region19: #{tpu_custom_call.1} parent=11 // pred_region
          %173 = vsyncadd [#allocation9], 0
          %s174 = sshll.u32 %s3, 4
          %s175 = int_to_ptr.hbm [resolvable:$true] %s174
          %s176 = sshll.u32 [#allocation8], 4
          %s177 = int_to_ptr.vmem [resolvable:$true] %s176
          %182 = dma.hbm_to_vmem [thread:$0]  %s175, 256, %s177, [#allocation9], 128, 128, 8
        $region20: #{tpu_custom_call.1} parent=11 // pred_fallthru
          _
      $region12: #{tpu_custom_call.1} parent=5 // pred_fallthru
        _
      %p183 = scmp.lt.s32.totalorder %s20, 8
      // Predicated region
      $region21: #{tpu_custom_call.1} parent=5 // pred_check
        %p184 = pneg %p183
      $region22: #{tpu_custom_call.1} parent=5 // pred_check_branch
        %186 = sbr.rel (%p184) target = $region24
      $region23: #{tpu_custom_call.1} parent=5 // pred_region
        // Predicated region
        $region25: #{tpu_custom_call.1} parent=23 // pred_check
          %p187 = pneg %p40
        $region26: #{tpu_custom_call.1} parent=23 // pred_check_branch
          %189 = sbr.rel (%p187) target = $region28
        $region27: #{tpu_custom_call.1} parent=23 // pred_region
          %s190 = sand.u32 %s30, 1
          %s191 = scalar_lea.sflag [#allocation3], %s190
          %s192 = sand.u32 %s30, 1
          %s193 = smul.addr %s192, 16
          %s194 = scalar_lea.vmem [#allocation2], %s193
          %196 = vsyncadd %s191, 0
          %s197 = smul.addr %s20, 2
          %s198 = smul.addr %s197, 8
          %s199 = scalar_lea.hbm %s0, %s198
          %s200 = sshll.u32 %s199, 4
          %s201 = int_to_ptr.hbm [resolvable:$true] %s200
          %s202 = sshll.u32 %s194, 4
          %s203 = int_to_ptr.vmem [resolvable:$true] %s202
          %208 = dma.hbm_to_vmem [thread:$0]  %s201, 256, %s203, %s191, 128, 128, 8
        $region28: #{tpu_custom_call.1} parent=23 // pred_fallthru
          _
        // Predicated region
        $region29: #{tpu_custom_call.1} parent=23 // pred_check
          %p209 = pneg %p66
        $region30: #{tpu_custom_call.1} parent=23 // pred_check_branch
          %211 = sbr.rel (%p209) target = $region32
        $region31: #{tpu_custom_call.1} parent=23 // pred_region
          %s212 = sand.u32 %s20, 1
          %s213 = scalar_lea.sflag [#allocation6], %s212
          %s214 = sand.u32 %s56, 1
          %s215 = smul.addr %s214, 16
          %s216 = scalar_lea.vmem [#allocation5], %s215
          %218 = vsyncadd %s213, 0
          %s219 = smul.addr %s20, 2
          %s220 = smul.addr %s219, 8
          %s221 = scalar_lea.hbm %s1, %s220
          %s222 = sshll.u32 %s221, 4
          %s223 = int_to_ptr.hbm [resolvable:$true] %s222
          %s224 = sshll.u32 %s216, 4
          %s225 = int_to_ptr.vmem [resolvable:$true] %s224
          %230 = dma.hbm_to_vmem [thread:$0]  %s223, 256, %s225, %s213, 128, 128, 8
        $region32: #{tpu_custom_call.1} parent=23 // pred_fallthru
          _
      $region24: #{tpu_custom_call.1} parent=5 // pred_fallthru
        _
      %p231 = scmp.le.s32.totalorder 1, %s20
      %p232 = scmp.lt.s32.totalorder %s20, 9
      %p233 = pnand %p231, %p232
      %p234 = pneg %p233
      // Predicated region
      $region33: #{tpu_custom_call.1} parent=5 // pred_check
        _
      $region34: #{tpu_custom_call.1} parent=5 // pred_check_branch
        %236 = sbr.rel (%p233) target = $region36
      $region35: #{tpu_custom_call.1} parent=5 // pred_region
        %s237 = ssub.s32 %s20, 1
        %s238 = sand.u32 %s33, 1
        %s239 = scalar_lea.sflag [#allocation3], %s238
        %s240 = sand.u32 %s33, 1
        %s241 = smul.addr %s240, 16
        %s242 = scalar_lea.vmem [#allocation2], %s241
        // Predicated region
        $region37: #{tpu_custom_call.1} parent=35 // pred_check
          %p243 = pneg %p46
        $region38: #{tpu_custom_call.1} parent=35 // pred_check_branch
          %245 = sbr.rel (%p243) target = $region40
        $region39: #{tpu_custom_call.1} parent=35 // pred_region
          %247 = dma.done %s239, 256
        $region40: #{tpu_custom_call.1} parent=35 // pred_fallthru
          _
        %s248 = sand.u32 %s25, 1
        %s249 = scalar_lea.sflag [#allocation6], %s248
        %s250 = sand.u32 %s59, 1
        %s251 = smul.addr %s250, 16
        %s252 = scalar_lea.vmem [#allocation5], %s251
        // Predicated region
        $region41: #{tpu_custom_call.1} parent=35 // pred_check
          %p253 = pneg %p72
        $region42: #{tpu_custom_call.1} parent=35 // pred_check_branch
          %255 = sbr.rel (%p253) target = $region44
        $region43: #{tpu_custom_call.1} parent=35 // pred_region
          %257 = dma.done %s249, 256
        $region44: #{tpu_custom_call.1} parent=35 // pred_fallthru
          _
        // Predicated region
        $region45: #{tpu_custom_call.1} parent=35 // pred_check
          %p258 = pneg %p93
        $region46: #{tpu_custom_call.1} parent=35 // pred_check_branch
          %260 = sbr.rel (%p258) target = $region48
        $region47: #{tpu_custom_call.1} parent=35 // pred_region
          %262 = dma.done [#allocation6], 256
        $region48: #{tpu_custom_call.1} parent=35 // pred_fallthru
          _
        // Predicated region
        $region49: #{tpu_custom_call.1} parent=35 // pred_check
          %p263 = pneg %p114
        $region50: #{tpu_custom_call.1} parent=35 // pred_check_branch
          %265 = sbr.rel (%p263) target = $region52
        $region51: #{tpu_custom_call.1} parent=35 // pred_region
          %267 = dma.done [#allocation9], 256
        $region52: #{tpu_custom_call.1} parent=35 // pred_fallthru
          _
        %s268 = sand.u32 %s33, 1
        %s269 = scalar_lea.sflag [#allocation3], %s268
        %s270 = sand.u32 %s33, 1
        %s271 = smul.addr %s270, 16
        %s272 = scalar_lea.vmem [#allocation2], %s271
        %p273 = pneg %p46
        %p274 = pneg %p43
        %s275 = sand.u32 %s25, 1
        %s276 = scalar_lea.sflag [#allocation6], %s275
        %s277 = sand.u32 %s59, 1
        %s278 = smul.addr %s277, 16
        %s279 = scalar_lea.vmem [#allocation5], %s278
        %p280 = pneg %p72
        %p281 = pneg %p69
        %p282 = pneg %p93
        %p283 = pneg %p90
        %p284 = pneg %p114
        %p285 = pneg %p111
        %p286 = pneg %p140
        %p287 = pneg %p137
        %s288 = sand.u32 %s127, 1
        %s289 = scalar_lea.sflag [#allocation4], %s288
        %s290 = sand.u32 %s127, 1
        %s291 = scalar_lea.vmem [#allocation10], %s290
        %v292 = vld [vmem:[%s242] sm:$0xff]
        %v293 = vld [vmem:[%s242 + $0x8] sm:$0xff]
        %v294 = vld [vmem:[%s252] sm:$0xff]
        %v295 = vld [vmem:[%s252 + $0x8] sm:$0xff]
        %v296 = vld [vmem:[#allocation7] sm:$0xff]
        %v297 = vld [vmem:[#allocation7 + $0x8] sm:$0xff]
        %v298 = vld [vmem:[#allocation8] sm:$0xff]
        %v299 = vld [vmem:[#allocation8 + $0x8] sm:$0xff]
        %v300 = vsub.f32 %v292, %v294
        %v301 = vsub.f32 %v293, %v295
        %v302 = vand.u32 2147483647, %v300
        %v303 = vand.u32 2147483647, %v301
        %vm304 = vcmp.eq.f32.partialorder %v292, 1.0
        %vm305 = vcmp.eq.f32.partialorder %v293, 1.0
        %v306 = vsel %vm304, 1, 0
        %v307 = vsel %vm305, 1, 0
        %v308 = vcvt.s32.f32 %v306
        %v309 = vcvt.s32.f32 %v307
        %vm310 = vcmask 130048
        %v312 = vsel %vm310, %v308, 0
        %v315 = vsel %vm310, %v309, 0
        %317 = vmatpush.msra.mxu0 0.0
        %318 = vmatpush.msra.mxu0 0.0
        %319 = vmatpush.msra.mxu0 0.0
        %320 = vmatpush.msra.mxu0 0.0
        %321 = vmatpush.msra.mxu0 0.0
        %322 = vmatpush.msra.mxu0 0.0
        %323 = vmatpush.msra.mxu0 0.0
        %324 = vmatpush.msra.mxu0 0.0
        %325 = vmatpush.msra.mxu0 0.0
        %326 = vmatpush.msra.mxu0 0.0
        %327 = vmatpush.msra.mxu0 0.0
        %328 = vmatpush.msra.mxu0 0.0
        %329 = vmatpush.msra.mxu0 0.0
        %330 = vmatpush.msra.mxu0 0.0
        %331 = vmatpush.msra.mxu0 %v299
        %332 = vmatpush.msra.mxu0 %v298
        %333 = vmatmul.f32.gmra.mxu0 %v312
        %v334 = vpop.f32.mrf.mxu0
        %v335 = vadd.f32 0.0, %v334
        %336 = vmatmul.f32.gmra.mxu0 %v315
        %v337 = vpop.f32.mrf.mxu0
        %v338 = vadd.f32 0.0, %v337
        %339 = vdwg.mxu0
        %v341 = vsel %vm310, %v296, 0
        %v344 = vsel %vm310, %v297, 0
        %346 = vmatpush.msra.mxu0 0.0
        %347 = vmatpush.msra.mxu0 0.0
        %348 = vmatpush.msra.mxu0 0.0
        %349 = vmatpush.msra.mxu0 0.0
        %350 = vmatpush.msra.mxu0 0.0
        %351 = vmatpush.msra.mxu0 0.0
        %352 = vmatpush.msra.mxu0 0.0
        %353 = vmatpush.msra.mxu0 0.0
        %354 = vmatpush.msra.mxu0 0.0
        %355 = vmatpush.msra.mxu0 0.0
        %356 = vmatpush.msra.mxu0 0.0
        %357 = vmatpush.msra.mxu0 0.0
        %358 = vmatpush.msra.mxu0 0.0
        %359 = vmatpush.msra.mxu0 0.0
        %360 = vmatpush.msra.mxu0 %v309
        %361 = vmatpush.msra.mxu0 %v308
        %362 = vmatmul.f32.gmra.mxu0 %v341
        %v363 = vpop.f32.mrf.mxu0
        %v364 = vadd.f32 %v335, %v363
        %365 = vmatmul.f32.gmra.mxu0 %v344
        %v366 = vpop.f32.mrf.mxu0
        %v367 = vadd.f32 %v338, %v366
        %368 = vdwg.mxu0
        %vm369 = vcmp.gt.f32.partialorder %v364, 0.5
        %vm370 = vcmp.gt.f32.partialorder %v367, 0.5
        %vm371 = vcmp.eq.f32.partialorder %v292, 0.25
        %vm372 = vcmp.eq.f32.partialorder %v293, 0.25
        %v373 = vsel %vm371, 1, 0
        %v374 = vsel %vm372, 1, 0
        %v375 = vcvt.s32.f32 %v373
        %v376 = vcvt.s32.f32 %v374
        %v378 = vsel %vm310, %v375, 0
        %v381 = vsel %vm310, %v376, 0
        %383 = vmatpush.msra.mxu0 0.0
        %384 = vmatpush.msra.mxu0 0.0
        %385 = vmatpush.msra.mxu0 0.0
        %386 = vmatpush.msra.mxu0 0.0
        %387 = vmatpush.msra.mxu0 0.0
        %388 = vmatpush.msra.mxu0 0.0
        %389 = vmatpush.msra.mxu0 0.0
        %390 = vmatpush.msra.mxu0 0.0
        %391 = vmatpush.msra.mxu0 0.0
        %392 = vmatpush.msra.mxu0 0.0
        %393 = vmatpush.msra.mxu0 0.0
        %394 = vmatpush.msra.mxu0 0.0
        %395 = vmatpush.msra.mxu0 0.0
        %396 = vmatpush.msra.mxu0 0.0
        %397 = vmatpush.msra.mxu0 %v299
        %398 = vmatpush.msra.mxu0 %v298
        %399 = vmatmul.f32.gmra.mxu0 %v378
        %v400 = vpop.f32.mrf.mxu0
        %v401 = vadd.f32 0.0, %v400
        %402 = vmatmul.f32.gmra.mxu0 %v381
        %v403 = vpop.f32.mrf.mxu0
        %v404 = vadd.f32 0.0, %v403
        %405 = vdwg.mxu0
        %406 = vmatpush.msra.mxu0 0.0
        %407 = vmatpush.msra.mxu0 0.0
        %408 = vmatpush.msra.mxu0 0.0
        %409 = vmatpush.msra.mxu0 0.0
        %410 = vmatpush.msra.mxu0 0.0
        %411 = vmatpush.msra.mxu0 0.0
        %412 = vmatpush.msra.mxu0 0.0
        %413 = vmatpush.msra.mxu0 0.0
        %414 = vmatpush.msra.mxu0 0.0
        %415 = vmatpush.msra.mxu0 0.0
        %416 = vmatpush.msra.mxu0 0.0
        %417 = vmatpush.msra.mxu0 0.0
        %418 = vmatpush.msra.mxu0 0.0
        %419 = vmatpush.msra.mxu0 0.0
        %420 = vmatpush.msra.mxu0 %v376
        %421 = vmatpush.msra.mxu0 %v375
        %422 = vmatmul.f32.gmra.mxu0 %v341
        %v423 = vpop.f32.mrf.mxu0
        %v424 = vadd.f32 %v401, %v423
        %425 = vmatmul.f32.gmra.mxu0 %v344
        %v426 = vpop.f32.mrf.mxu0
        %v427 = vadd.f32 %v404, %v426
        %428 = vdwg.mxu0
        %vm429 = vcmp.gt.f32.partialorder %v424, 0.5
        %vm430 = vcmp.gt.f32.partialorder %v427, 0.5
        %vm431 = vcmp.eq.f32.partialorder %v292, 0.0
        %vm432 = vcmp.eq.f32.partialorder %v293, 0.0
        %vm433 = vmand %vm371, %vm369
        %vm434 = vmand %vm372, %vm370
        %v435 = vsel %vm433, 0.75, 0.0
        %v436 = vsel %vm434, 0.75, 0.0
        %vm437 = vmand %vm431, %vm429
        %vm438 = vmand %vm432, %vm430
        %v439 = vsel %vm437, 0.25, 0.0
        %v440 = vsel %vm438, 0.25, 0.0
        %v441 = vmax.f32 %v435, %v439
        %v442 = vmax.f32 %v436, %v440
        %vm443 = vmand %vm431, %vm369
        %vm444 = vmand %vm432, %vm370
        %v445 = vsel %vm443, 1.0, 0.0
        %v446 = vsel %vm444, 1.0, 0.0
        %v447 = vmax.f32 %v441, %v445
        %v448 = vmax.f32 %v442, %v446
        %v449 = vmul.f32 %v302, %v447
        %v450 = vmul.f32 %v303, %v448
        %v451 = vsel %vm310, %v449, 0.0
        %v452 = vsel %vm310, %v450, 0.0
        %v453 = vadd.f32 %v451, %v452
        %v454 = vrot.slane %v453, 4
        %v455 = vadd.f32 %v453, %v454
        %v456 = vrot.slane %v455, 2
        %v457 = vadd.f32 %v455, %v456
        %v458 = vrot.slane %v457, 1
        %v459 = vadd.f32 %v457, %v458
        %vm460 = vcmask 122880
        %461 = vst.msk [vmem:[%s291] sm:$0x1] %vm460, %v459
        %s462 = sand.u32 %s127, 1
        %s463 = scalar_lea.sflag [#allocation4], %s462
        %s464 = sand.u32 %s127, 1
        %s465 = scalar_lea.vmem [#allocation10], %s464
        // Predicated region
        $region53: #{tpu_custom_call.1} parent=35 // pred_check
          %p466 = pneg %p137
        $region54: #{tpu_custom_call.1} parent=35 // pred_check_branch
          %468 = sbr.rel (%p466) target = $region56
        $region55: #{tpu_custom_call.1} parent=35 // pred_region
          %470 = vsyncadd %s463, 0
          %s471 = scalar_lea.hbm %s4, %s25
          %s473 = sshll.u32 %s465, 4
          %s474 = int_to_ptr.vmem [resolvable:$true] %s473
          %s475 = sshll.u32 %s471, 4
          %s476 = int_to_ptr.hbm [resolvable:$true] %s475
          %478 = dma.vmem_to_hbm [thread:$0]  %s474, 16, %s476, %s463
        $region56: #{tpu_custom_call.1} parent=35 // pred_fallthru
          _
      $region36: #{tpu_custom_call.1} parent=5 // pred_fallthru
        _
      %p479 = scmp.le.s32.totalorder 2, %s20
      // Predicated region
      $region57: #{tpu_custom_call.1} parent=5 // pred_check
        %p480 = pneg %p479
      $region58: #{tpu_custom_call.1} parent=5 // pred_check_branch
        %482 = sbr.rel (%p480) target = $region60
      $region59: #{tpu_custom_call.1} parent=5 // pred_region
        %s483 = ssub.s32 %s20, 2
        // Predicated region
        $region61: #{tpu_custom_call.1} parent=59 // pred_check
          %p484 = pneg %p143
        $region62: #{tpu_custom_call.1} parent=59 // pred_check_branch
          %486 = sbr.rel (%p484) target = $region64
        $region63: #{tpu_custom_call.1} parent=59 // pred_region
          %s487 = sand.u32 %s128, 1
          %s488 = scalar_lea.sflag [#allocation4], %s487
          %s489 = sand.u32 %s128, 1
          %s490 = scalar_lea.vmem [#allocation10], %s489
          %492 = dma.done %s488, 16
        $region64: #{tpu_custom_call.1} parent=59 // pred_fallthru
          _
      $region60: #{tpu_custom_call.1} parent=5 // pred_fallthru
        _
    $region6: #{tpu_custom_call.1} parent=1 // loop_footer
      %s24 = sadd.s32 1, %s20
    $region7: #{tpu_custom_call.1} parent=1 // loop_footer_branch
      %19 = sbr.rel target = $region3
    $region8: #{tpu_custom_call.1} parent=1 // loop_exit
      _
    %493 = vsyncpa [#allocation3], 1
    %s494 = scalar_lea.sflag [#allocation3], 1
    %495 = vsyncpa %s494, 1
    %496 = vsyncpa [#allocation6], 1
    %s497 = scalar_lea.sflag [#allocation6], 1
    %498 = vsyncpa %s497, 1
    %499 = vsyncpa [#allocation9], 1
    %500 = vsyncpa [#allocation4], 1
    %s501 = scalar_lea.sflag [#allocation4], 1
    %502 = vsyncpa %s501, 1

</llo_original>
